<compile_context>
chip_gen: v7x
topology: tpu7x:2x2x1
jax: 0.10.0
libtpu: 0.0.40
codegen_flags: <defaults>
</compile_context>

<pallas_src>
import functools

import jax
import jax.numpy as jnp
from jax.experimental import pallas as pl
from jax.experimental.pallas import tpu as pltpu


def _rescale_kernel(x_ref, o_ref, *, is_byte, bipolar):
    # Pure VPU elementwise hot path; branches are static Python bools resolved
    # at trace time, mirroring the PyTorch op sequence exactly.
    x = x_ref[...].astype(jnp.float32)
    if is_byte:
        x = x / jnp.float32(255.0)
    if bipolar:
        x = x * jnp.float32(2.0) - jnp.float32(1.0)
    o_ref[...] = x.astype(o_ref.dtype)


def _rescale_math(x, *, is_byte, bipolar, out_dtype):
    # Plain-jnp fallback used for the tiny ragged tail (< 128 elements).
    x = x.astype(jnp.float32)
    if is_byte:
        x = x / 255.0
    if bipolar:
        x = x * 2.0 - 1.0
    return x.astype(out_dtype)


def _tpu_vmem_capacity():
    try:
        info = pltpu.get_tpu_info()
        return getattr(info, "vmem_capacity_bytes", None)
    except Exception:
        return None


def rescale(x, mode="bipolar", *, out_dtype=jnp.float32, target_block_elems=None):
    """Pallas implementation of Rescale.forward for an arbitrary-shape array."""
    is_byte = (x.dtype == jnp.uint8)
    bipolar = (mode == "bipolar")

    # Identity short-circuit: nothing to compute, avoid a pure HBM->HBM stream.
    if not is_byte and not bipolar:
        return x.astype(out_dtype)

    orig_shape = x.shape
    n_elems = x.size
    if n_elems == 0:
        return jnp.zeros(orig_shape, out_dtype)

    # ---- Generation-aware tuning (v5e/v6e: 128 MiB VMEM; v7x: 64 MiB, 2 TCs).
    vmem_cap = _tpu_vmem_capacity()
    big_vmem = (vmem_cap is not None) and (vmem_cap >= (96 << 20))
    if target_block_elems is None:
        # 2M elems -> 8 MiB f32 out block (32 MiB double-buffered in+out) on
        # v5e/v6e; 1M elems (16 MiB footprint) on v7x / unknown chips.
        target_block_elems = (2 << 20) if big_vmem else (1 << 20)
    vmem_limit = (64 << 20) if big_vmem else (40 << 20)

    in_itemsize = jnp.dtype(x.dtype).itemsize
    out_itemsize = jnp.dtype(out_dtype).itemsize

    # ---- Split into a 128-aligned main region (kernel) + tiny tail (jnp).
    flat = x.reshape(-1)
    n_main = (n_elems // 128) * 128
    tail = flat[n_main:] if n_main < n_elems else None

    if n_main == 0:
        # Entire array is smaller than one lane row; kernel launch not worth it.
        return _rescale_math(x, is_byte=is_byte, bipolar=bipolar,
                             out_dtype=out_dtype).reshape(orig_shape)

    flat_main = flat[:n_main] if tail is not None else flat

    # Widest lane (last) dim dividing the aligned length -> long unmasked vst
    # bursts and few, large DMA descriptors.
    for lane in (1024, 512, 256, 128):
        if n_main % lane == 0:
            break
    rows = n_main // lane
    x2d = flat_main.reshape(rows, lane)

    # Block rows: multiple of 32 (honors the uint8 (32,128) packed tile) unless
    # it equals the full row extent.
    block_rows = min(target_block_elems // lane, rows)
    if not big_vmem and rows >= 64:
        # v7x-style chips: guarantee >= 2 grid steps so the parallel axis can
        # shard across both TensorCores (costs nothing for large arrays).
        half_rows = ((rows + 1) // 2 + 31) // 32 * 32
        block_rows = min(block_rows, half_rows)
    grid = (pl.cdiv(rows, block_rows),)  # ragged last block is masked by Pallas

    kernel = functools.partial(_rescale_kernel, is_byte=is_byte, bipolar=bipolar)

    flops_per_elem = (1 if is_byte else 0) + (2 if bipolar else 0)
    cost = pl.CostEstimate(
        flops=flops_per_elem * n_main,
        transcendentals=0,
        bytes_accessed=n_main * (in_itemsize + out_itemsize),
    )

    out2d = pl.pallas_call(
        kernel,
        out_shape=jax.ShapeDtypeStruct((rows, lane), out_dtype),
        grid_spec=pltpu.PrefetchScalarGridSpec(
            num_scalar_prefetch=0,
            grid=grid,
            in_specs=[pl.BlockSpec((block_rows, lane), lambda i: (i, 0))],
            out_specs=pl.BlockSpec((block_rows, lane), lambda i: (i, 0)),
        ),
        compiler_params=pltpu.CompilerParams(
            dimension_semantics=("parallel",),
            vmem_limit_bytes=vmem_limit,
        ),
        cost_estimate=cost,
    )(x2d)

    out_flat = out2d.reshape(-1)
    if tail is not None:
        out_flat = jnp.concatenate(
            [out_flat,
             _rescale_math(tail, is_byte=is_byte, bipolar=bipolar,
                           out_dtype=out_dtype)])
    return out_flat.reshape(orig_shape)


def _rescale_ref(x, mode="bipolar"):
    # Pure-JAX reference mirroring the PyTorch forward.
    if x.dtype == jnp.uint8:
        x = x.astype(jnp.float32) / 255.0
    if mode == "bipolar":
        x = x * 2.0 - 1.0
    return x.astype(jnp.float32)


# TODO(synk): Rescale.invert ((x+1)/2, optional *255 -> byte) not implemented;
# only the forward pass was requested.

if __name__ == "__main__":
    key = jax.random.PRNGKey(0)
    k1, k2, k3 = jax.random.split(key, 3)

    # Small NCHW input, byte ("image") case.
    x_byte = jax.random.randint(
        k1, (2, 4, 16, 16), 0, 256, dtype=jnp.int32).astype(jnp.uint8)
    # Float case (already in [0, 1]).
    x_float = jax.random.uniform(k2, (2, 4, 16, 16), dtype=jnp.float32)
    # A shape whose total size is NOT a multiple of 128 (ragged-tail path).
    x_ragged = jax.random.uniform(k3, (2, 3, 15, 15), dtype=jnp.float32)

    y_byte = jax.block_until_ready(rescale(x_byte, mode="bipolar"))
    y_float = jax.block_until_ready(rescale(x_float, mode="bipolar"))
    y_unipolar = jax.block_until_ready(rescale(x_float, mode="unipolar"))
    y_ragged = jax.block_until_ready(rescale(x_ragged, mode="bipolar"))
    y_bf16 = jax.block_until_ready(
        rescale(x_byte, mode="bipolar", out_dtype=jnp.bfloat16))

    assert jnp.allclose(y_byte, _rescale_ref(x_byte, "bipolar"), atol=1e-6)
    assert jnp.allclose(y_float, _rescale_ref(x_float, "bipolar"), atol=1e-6)
    assert jnp.allclose(y_unipolar, _rescale_ref(x_float, "unipolar"), atol=1e-6)
    assert jnp.allclose(y_ragged, _rescale_ref(x_ragged, "bipolar"), atol=1e-6)
    assert jnp.allclose(y_bf16.astype(jnp.float32),
                        _rescale_ref(x_byte, "bipolar"), atol=1e-2)
    assert y_byte.shape == x_byte.shape and y_byte.dtype == jnp.float32
    assert y_ragged.shape == x_ragged.shape and y_ragged.dtype == jnp.float32
    assert y_bf16.dtype == jnp.bfloat16

    print("KERNEL_OK")
</pallas_src>

<mosaic_0001>
module attributes {stable_mosaic.version = 11 : i64} {
  func.func @_rescale_kernel(%arg0: i32, %arg1: memref<2x1024xi8, #tpu.memory_space<vmem>>, %arg2: memref<2x1024xf32, #tpu.memory_space<vmem>>) attributes {dimension_semantics = [#tpu.dimension_semantics<parallel>], iteration_bounds = array<i64: 1>, scalar_prefetch = 0 : i64, scratch_operands = 0 : i64, tpu.core_type = #tpu.core_type<tc>, window_params = [{transform_indices = @transform_0, window_bounds = array<i64: 2, 1024>}, {transform_indices = @transform_1, window_bounds = array<i64: 2, 1024>}]} {
    %c0 = arith.constant 0 : index
    %c0_0 = arith.constant 0 : index
    %0 = vector.load %arg1[%c0, %c0_0] : memref<2x1024xi8, #tpu.memory_space<vmem>>, vector<2x1024xi8>
    %1 = arith.uitofp %0 : vector<2x1024xi8> to vector<2x1024xf32>
    %cst = arith.constant 2.550000e+02 : f32
    %2 = vector.broadcast %cst : f32 to vector<2x1024xf32>
    %3 = arith.divf %1, %2 : vector<2x1024xf32>
    %cst_1 = arith.constant 2.000000e+00 : f32
    %4 = vector.broadcast %cst_1 : f32 to vector<2x1024xf32>
    %5 = arith.mulf %3, %4 : vector<2x1024xf32>
    %cst_2 = arith.constant 1.000000e+00 : f32
    %6 = vector.broadcast %cst_2 : f32 to vector<2x1024xf32>
    %7 = arith.subf %5, %6 : vector<2x1024xf32>
    %c0_3 = arith.constant 0 : index
    %c0_4 = arith.constant 0 : index
    %8 = vector.load %arg2[%c0_3, %c0_4] : memref<2x1024xf32, #tpu.memory_space<vmem>>, vector<2x1024xf32>
    tpu.vector_store %arg2[%c0_3, %c0_4], %7 {strides = array<i32>} : memref<2x1024xf32, #tpu.memory_space<vmem>>, vector<2x1024xf32>,
    return
  }
  func.func @transform_0(%arg0: i32) -> (i32, i32) {
    %c0_i32 = arith.constant 0 : i32
    %c0_i32_0 = arith.constant 0 : i32
    return %arg0, %c0_i32 : i32, i32
  }
  func.func @transform_1(%arg0: i32) -> (i32, i32) {
    %c0_i32 = arith.constant 0 : i32
    %c0_i32_0 = arith.constant 0 : i32
    return %arg0, %c0_i32 : i32, i32
  }
}

</mosaic_0001>

<llo_original>
// kernel: tpu_custom_call.1
$region0: #{tpu_custom_call.1}
  #allocation0 [shape = 'u32[]', space=smem, size = 0x4, offset = 0x4, fixed_abs, tag = 'smem constant byte address 0x4 - core index']
  #allocation1 [shape = 'u32[144,128]{1,0:T(1,128)}', space=vmem, size = 0x12000, scoped, tag = 'internal scratch']
  %s0 = inlined_call_operand.hbm [shape: u8[2,1024], index: 0, kind: input, shape index: {}]
  %s1 = inlined_call_operand.hbm [shape: f32[2,1024], index: 1, kind: output, shape index: {}]
  %s2 = sld [smem:[#allocation0]]
  $region18: #{tpu_custom_call.1} parent=0
    _
  %s4 = ssub.s32 1, %s2
  %s5 = scalar_select 0, %s4, %s2
  $region1: #{tpu_custom_call.1} parent=0
    #allocation2 [shape = 'u8[4096]{0}', space=vmem, size = 0x1000, scoped, tag = 'input window, operand 0, single buffered']
    #allocation3 [shape = 's32[1]{0}', space=sflag, size = 0x4, scoped, tag = 'scoped memory for tpu_custom_call.1']
    #allocation4 [shape = 's32[1]{0}', space=sflag, size = 0x4, scoped, tag = 'scoped memory for tpu_custom_call.1']
    #allocation5 [shape = 'u8[8192]{0}', space=vmem, size = 0x2000, scoped, tag = 'output window, operand 0, single buffered']
    %6 = vsyncpa [#allocation3], 0
    %7 = vsyncpa [#allocation4], 0
    // Predicated region
    $region2: #{tpu_custom_call.1} parent=1 // pred_check
      _
    $region3: #{tpu_custom_call.1} parent=1 // pred_check_branch
      %9 = sbr.rel (0) target = $region5
    $region4: #{tpu_custom_call.1} parent=1 // pred_region
      %s11 = ssub.s32 128, 128
      %12 = vsyncadd [#allocation3], %s11
      %s14 = sshll.u32 [#allocation2], 4
      %s15 = int_to_ptr.vmem [resolvable:$true] %s14
      %17 = dma.hbm_to_vmem [thread:$0]  %s0, 128, %s15, [#allocation3]
    $region5: #{tpu_custom_call.1} parent=1 // pred_fallthru
      _
    // Predicated region
    $region6: #{tpu_custom_call.1} parent=1 // pred_check
      _
    $region7: #{tpu_custom_call.1} parent=1 // pred_check_branch
      %19 = sbr.rel (0) target = $region9
    $region8: #{tpu_custom_call.1} parent=1 // pred_region
      %20 = dma.done [#allocation3], 128
    $region9: #{tpu_custom_call.1} parent=1 // pred_fallthru
      _
    %v21 = vld [vmem:[#allocation2] sm:$0xff]
    %v22 = vunpack.c.0.s8 %v21
    %v23 = vunpack.c.1.s8 %v21
    %v24 = vunpack.c.2.s8 %v21
    %v25 = vunpack.c.3.s8 %v21
    %v26 = vand.u32 %v22, 255
    %v27 = vand.u32 %v23, 255
    %v28 = vand.u32 %v24, 255
    %v29 = vand.u32 %v25, 255
    %v30 = vcvt.s32.f32 %v26
    %v31 = vcvt.s32.f32 %v27
    %v32 = vcvt.s32.f32 %v28
    %v33 = vcvt.s32.f32 %v29
    %v34 = vrcp.pop 255.0
    %v35 = vmul.f32 %v30, %v34
    %v36 = vmul.f32 %v31, %v34
    %v37 = vmul.f32 %v32, %v34
    %v38 = vmul.f32 %v33, %v34
    %v39 = vmul.f32 %v35, 2.0
    %v40 = vmul.f32 %v36, 2.0
    %v41 = vmul.f32 %v37, 2.0
    %v42 = vmul.f32 %v38, 2.0
    %v43 = vsub.f32 %v39, 1.0
    %v44 = vsub.f32 %v40, 1.0
    %v45 = vsub.f32 %v41, 1.0
    %v46 = vsub.f32 %v42, 1.0
    %v52 = vunpack.c.l.s4 1983009808
    %v53 = vunpack.c.0.s8 %v52
    %v54 = vlaneseq
    %v55 = vshrl.u32 %v54, 7
    %v56 = vsub.s32 %v53, %v55
    %v57 = vrot.slane %v43, %v56
    %v59 = vunpack.c.l.s4 1983009808
    %v60 = vunpack.c.0.s8 %v59
    %v61 = vlaneseq
    %v62 = vshrl.u32 %v61, 7
    %v63 = vsub.s32 %v60, %v62
    %v64 = vrot.slane %v44, %v63
    %v65 = vcombine.low %v57, %v64
    %v67 = vunpack.c.l.s4 1983009808
    %v68 = vunpack.c.0.s8 %v67
    %v69 = vlaneseq
    %v70 = vshrl.u32 %v69, 7
    %v71 = vsub.s32 %v68, %v70
    %v72 = vrot.slane %v45, %v71
    %v74 = vunpack.c.l.s4 1983009808
    %v75 = vunpack.c.0.s8 %v74
    %v76 = vlaneseq
    %v77 = vshrl.u32 %v76, 7
    %v78 = vsub.s32 %v75, %v77
    %v79 = vrot.slane %v46, %v78
    %v80 = vcombine.low %v72, %v79
    %83 = vst [vmem:[#allocation5] sm:$0xff] %v65
    %84 = vst [vmem:[#allocation5 + $0x8] sm:$0xff] %v80
    // Predicated region
    $region10: #{tpu_custom_call.1} parent=1 // pred_check
      _
    $region11: #{tpu_custom_call.1} parent=1 // pred_check_branch
      %86 = sbr.rel (0) target = $region13
    $region12: #{tpu_custom_call.1} parent=1 // pred_region
      %s88 = ssub.s32 256, 256
      %89 = vsyncadd [#allocation4], %s88
      %s91 = sshll.u32 [#allocation5], 4
      %s92 = int_to_ptr.vmem [resolvable:$true] %s91
      %94 = dma.vmem_to_hbm [thread:$0]  %s92, 256, %s1, [#allocation4]
    $region13: #{tpu_custom_call.1} parent=1 // pred_fallthru
      _
    // Predicated region
    $region14: #{tpu_custom_call.1} parent=1 // pred_check
      _
    $region15: #{tpu_custom_call.1} parent=1 // pred_check_branch
      %96 = sbr.rel (0) target = $region17
    $region16: #{tpu_custom_call.1} parent=1 // pred_region
      %97 = dma.done [#allocation4], 256
    $region17: #{tpu_custom_call.1} parent=1 // pred_fallthru
      _
    %98 = vsyncpa [#allocation3], 1
    %99 = vsyncpa [#allocation4], 1

</llo_original>
